<compile_context>
chip_gen: v6e
topology: v6e:2x2x1
jax: 0.10.0
libtpu: 0.0.40
codegen_flags: <defaults>
</compile_context>

<pallas_src>
import functools

import jax
import jax.numpy as jnp
from jax.experimental import pallas as pl
from jax.experimental.pallas import tpu as pltpu


# ---------------------------------------------------------------------------
# small helpers
# ---------------------------------------------------------------------------
def _round_up(x, m):
    return (x + m - 1) // m * m


def _choose_tile_bs(bs, k, target_rows):
    """Pick TILE_BS (multiple of 8) so TILE_BS*K ~ target_rows rows/block."""
    tile_bs = (max(target_rows // max(k, 1), 8) // 8) * 8
    tile_bs = max(tile_bs, 8)
    tile_bs = min(tile_bs, _round_up(bs, 8))
    return tile_bs


def _vmem_limit(need_bytes):
    # Generous headroom for double-buffering, but stay under v7x's 64 MiB.
    return int(min(max(2 * need_bytes + (4 << 20), 8 << 20), 48 << 20))


# ---------------------------------------------------------------------------
# Plain-JAX glue: sampling / grouping (data-dependent argmax / sort / gather)
# ---------------------------------------------------------------------------
def farthest_point_sample(xyz, npoint, key):
    """xyz: [B, N, 3] -> indices [B, npoint] (int32)."""
    B, N, _ = xyz.shape
    distance = jnp.full((B, N), 1e10, dtype=jnp.float32)
    farthest = jax.random.randint(key, (B,), 0, N, dtype=jnp.int32)
    batch_indices = jnp.arange(B)
    centroids = []
    for _ in range(npoint):
        centroids.append(farthest)
        centroid = xyz[batch_indices, farthest, :][:, None, :]          # [B,1,3]
        dist = jnp.sum((xyz - centroid) ** 2, axis=-1)                  # [B,N]
        distance = jnp.minimum(distance, dist)
        farthest = jnp.argmax(distance, axis=-1).astype(jnp.int32)
    return jnp.stack(centroids, axis=1)                                 # [B,npoint]


def index_points(points, idx):
    """points [B,N,C], idx [B,S] -> [B,S,C]."""
    return jnp.take_along_axis(points, idx[..., None], axis=1)


def index_points_group(points, idx):
    """points [B,N,C], idx [B,S,K] -> [B,S,K,C]."""
    B, S, K = idx.shape
    flat = jnp.take_along_axis(points, idx.reshape(B, S * K)[..., None], axis=1)
    return flat.reshape(B, S, K, points.shape[-1])


def square_distance(src, dst):
    """src [B,N,C], dst [B,M,C] -> [B,N,M]."""
    dist = -2.0 * jnp.matmul(src, jnp.swapaxes(dst, 1, 2))
    dist = dist + jnp.sum(src ** 2, axis=-1)[..., None]
    dist = dist + jnp.sum(dst ** 2, axis=-1)[:, None, :]
    return dist


def query_ball_point(radius, nsample, xyz, new_xyz):
    """xyz [B,N,3], new_xyz [B,S,3] -> group_idx [B,S,nsample] (int32)."""
    B, N, _ = xyz.shape
    S = new_xyz.shape[1]
    group_idx = jnp.broadcast_to(jnp.arange(N, dtype=jnp.int32)[None, None, :],
                                 (B, S, N))
    sqrdists = square_distance(new_xyz, xyz)
    group_idx = jnp.where(sqrdists > radius ** 2, jnp.int32(N), group_idx)
    group_idx = jnp.sort(group_idx, axis=-1)[:, :, :nsample]
    group_first = jnp.repeat(group_idx[:, :, :1], nsample, axis=-1)
    group_idx = jnp.where(group_idx == N, group_first, group_idx)
    return group_idx


# ---------------------------------------------------------------------------
# Pallas kernels
# ---------------------------------------------------------------------------
def _partial_stats(y, row_start, valid_rows, mask_rows):
    """Per-block partial per-channel sum / sum-of-squares -> [8, C] slab."""
    if mask_rows:
        ridx = jax.lax.broadcasted_iota(jnp.int32, y.shape, 0) + row_start
        ym = jnp.where(ridx < valid_rows, y, 0.0)
    else:
        ym = y
    s = jnp.sum(ym, axis=0, keepdims=True)
    sq = jnp.sum(ym * y, axis=0, keepdims=True)       # mask is {0,1}: ym*y = mask*y^2
    pad = jnp.zeros((6, y.shape[-1]), jnp.float32)
    return jnp.concatenate([s, sq, pad], axis=0)


def _matmul_stats_kernel(x_ref, w_ref, y_ref, stats_ref, *,
                         tile_rows, valid_rows, mask_rows, mm_dtype):
    """First layer: 1x1 conv matmul + BN partial statistics."""
    y = jnp.dot(x_ref[...].astype(mm_dtype), w_ref[...],
                preferred_element_type=jnp.float32)
    y_ref[...] = y
    stats_ref[...] = _partial_stats(y, pl.program_id(0) * tile_rows,
                                    valid_rows, mask_rows)


def _bn_relu_matmul_stats_kernel(y_ref, scale_ref, shift_ref, w_ref,
                                 out_ref, stats_ref, *,
                                 tile_rows, valid_rows, mask_rows, mm_dtype):
    """Middle layers: fold previous layer's BN+ReLU, then matmul + stats."""
    h = jnp.maximum(y_ref[...] * scale_ref[...] + shift_ref[...], 0.0)
    y = jnp.dot(h.astype(mm_dtype), w_ref[...],
                preferred_element_type=jnp.float32)
    out_ref[...] = y
    stats_ref[...] = _partial_stats(y, pl.program_id(0) * tile_rows,
                                    valid_rows, mask_rows)


def _bn_relu_max_kernel(y_ref, scale_ref, shift_ref, out_ref, *,
                        tile_bs, nsample):
    """Last layer's BN+ReLU fused with the max over the K neighbor axis."""
    h = jnp.maximum(y_ref[...] * scale_ref[...] + shift_ref[...], 0.0)
    c = h.shape[-1]
    out_ref[...] = jnp.max(h.reshape(tile_bs, nsample, c), axis=1)


# ---------------------------------------------------------------------------
# pallas_call wrappers
# ---------------------------------------------------------------------------
def _layer_call(x, w_p, scale, shift, *, tile_rows, num_blocks, valid_rows,
                mm_dtype):
    """One 1x1-conv layer over a row-tiled grid.

    Emits the pre-BN activation stream [R_pad, Cout_pad] plus per-block BN
    partial statistics [num_blocks*8, Cout_pad].  If scale/shift are given,
    the previous layer's BN+ReLU is fused in front of the matmul.
    """
    r_pad, cin = x.shape
    cout_pad = w_p.shape[1]
    mask_rows = valid_rows != r_pad

    row_spec = pl.BlockSpec((tile_rows, cin), lambda i: (i, 0))
    w_spec = pl.BlockSpec(w_p.shape, lambda i: (0, 0))
    vec_spec = pl.BlockSpec((1, cin), lambda i: (0, 0))
    out_specs = [pl.BlockSpec((tile_rows, cout_pad), lambda i: (i, 0)),
                 pl.BlockSpec((8, cout_pad), lambda i: (i, 0))]
    out_shape = [jax.ShapeDtypeStruct((r_pad, cout_pad), jnp.float32),
                 jax.ShapeDtypeStruct((num_blocks * 8, cout_pad), jnp.float32)]

    kw = dict(tile_rows=tile_rows, valid_rows=valid_rows,
              mask_rows=mask_rows, mm_dtype=mm_dtype)
    if scale is None:
        kernel = functools.partial(_matmul_stats_kernel, **kw)
        in_specs = [row_spec, w_spec]
        args = (x, w_p)
    else:
        kernel = functools.partial(_bn_relu_matmul_stats_kernel, **kw)
        in_specs = [row_spec, vec_spec, vec_spec, w_spec]
        args = (x, scale, shift, w_p)

    x_blk = tile_rows * cin * x.dtype.itemsize
    y_blk = tile_rows * cout_pad * 4
    need = 2 * (x_blk + y_blk + 8 * cout_pad * 4) \
        + 2 * w_p.size * w_p.dtype.itemsize + 4 * cin * 4
    flops = 2 * r_pad * cin * cout_pad + 6 * r_pad * cout_pad
    bytes_accessed = (x.size * x.dtype.itemsize
                      + w_p.size * w_p.dtype.itemsize
                      + r_pad * cout_pad * 4
                      + num_blocks * 8 * cout_pad * 4)

    y, stats = pl.pallas_call(
        kernel,
        grid=(num_blocks,),
        in_specs=in_specs,
        out_specs=out_specs,
        out_shape=out_shape,
        compiler_params=pltpu.CompilerParams(
            dimension_semantics=("parallel",),
            vmem_limit_bytes=_vmem_limit(need)),
        cost_estimate=pl.CostEstimate(flops=int(flops), transcendentals=0,
                                      bytes_accessed=int(bytes_accessed)),
    )(*args)
    return y, stats


def _maxpool_call(y, scale, shift, *, tile_bs, nsample, num_blocks):
    """Final BN + ReLU + max over the K neighbor axis, row-tiled."""
    r_pad, c_pad = y.shape
    tile_rows = tile_bs * nsample
    bs_pad = num_blocks * tile_bs
    kernel = functools.partial(_bn_relu_max_kernel, tile_bs=tile_bs,
                               nsample=nsample)
    need = 2 * (tile_rows * c_pad * 4 + tile_bs * c_pad * 4) + 4 * c_pad * 4
    out = pl.pallas_call(
        kernel,
        grid=(num_blocks,),
        in_specs=[pl.BlockSpec((tile_rows, c_pad), lambda i: (i, 0)),
                  pl.BlockSpec((1, c_pad), lambda i: (0, 0)),
                  pl.BlockSpec((1, c_pad), lambda i: (0, 0))],
        out_specs=pl.BlockSpec((tile_bs, c_pad), lambda i: (i, 0)),
        out_shape=jax.ShapeDtypeStruct((bs_pad, c_pad), jnp.float32),
        compiler_params=pltpu.CompilerParams(
            dimension_semantics=("parallel",),
            vmem_limit_bytes=_vmem_limit(need)),
        cost_estimate=pl.CostEstimate(
            flops=int(4 * r_pad * c_pad), transcendentals=0,
            bytes_accessed=int(r_pad * c_pad * 4 + bs_pad * c_pad * 4)),
    )(y, scale, shift)
    return out


# ---------------------------------------------------------------------------
# Per-scale MLP:  conv1x1 -> BN(train) -> ReLU  (x L)  -> max over neighbors
# ---------------------------------------------------------------------------
def msg_mlp_max(grouped, layer_params, *, mm_dtype=jnp.bfloat16,
                target_rows=1024):
    """grouped [B,S,K,C0] channels-last -> [B,S,C_last] (max over K)."""
    B, S, K, C0 = grouped.shape
    bs = B * S
    n_valid = bs * K
    assert layer_params[0][0].shape[0] == C0

    tile_bs = _choose_tile_bs(bs, K, target_rows)
    bs_pad = _round_up(bs, tile_bs)
    num_blocks = bs_pad // tile_bs
    tile_rows = tile_bs * K
    r_pad = bs_pad * K

    # Row slab [B*S*K, C0]; cast to the MXU feed dtype, pad rows (zeros) so
    # the row grid divides evenly.  Padded rows are masked out of BN stats
    # and sliced off the final output.
    x = grouped.reshape(n_valid, C0).astype(mm_dtype)
    if r_pad > n_valid:
        x = jnp.pad(x, ((0, r_pad - n_valid), (0, 0)))

    eps = 1e-5
    couts = [w.shape[1] for (w, _, _, _) in layer_params]
    couts_pad = [_round_up(c, 128) for c in couts]

    y, scale, shift = x, None, None
    for j, (w, _b, g, be) in enumerate(layer_params):
        cin = w.shape[0]
        cin_pad = C0 if j == 0 else couts_pad[j - 1]
        cout, cout_pad = couts[j], couts_pad[j]

        # Lane-dense (128-multiple) output channels; zero padding.
        # NOTE: the conv bias _b is dropped -- training-mode BatchNorm
        # subtracts the batch mean, which cancels it exactly.
        w_p = jnp.zeros((cin_pad, cout_pad), mm_dtype)
        w_p = w_p.at[:cin, :cout].set(w.astype(mm_dtype))

        y, stats = _layer_call(y, w_p, scale, shift, tile_rows=tile_rows,
                               num_blocks=num_blocks, valid_rows=n_valid,
                               mm_dtype=mm_dtype)

        # Reduce per-block partial sums -> batch mean / biased variance, then
        # fold BN into one per-channel scale + shift (padded channels -> 0).
        stats = stats.reshape(num_blocks, 8, cout_pad)
        ssum = jnp.sum(stats[:, 0, :], axis=0)
        ssq = jnp.sum(stats[:, 1, :], axis=0)
        mean = ssum / n_valid
        var = jnp.maximum(ssq / n_valid - mean * mean, 0.0)
        g_p = jnp.zeros((cout_pad,), jnp.float32).at[:cout].set(
            g.reshape(-1).astype(jnp.float32))
        be_p = jnp.zeros((cout_pad,), jnp.float32).at[:cout].set(
            be.reshape(-1).astype(jnp.float32))
        sc = g_p * jax.lax.rsqrt(var + eps)
        scale = sc.reshape(1, cout_pad)
        shift = (be_p - mean * sc).reshape(1, cout_pad)

    out = _maxpool_call(y, scale, shift, tile_bs=tile_bs, nsample=K,
                        num_blocks=num_blocks)                  # [bs_pad, Cpad]
    return out[:bs, :couts[-1]].reshape(B, S, couts[-1])


def msg_mlp_max_reference(grouped, layer_params):
    """Plain-JAX f32 reference of the MLP/BN/ReLU/max path (for checking)."""
    B, S, K, C0 = grouped.shape
    h = grouped.reshape(B * S * K, C0).astype(jnp.float32)
    for (w, b, g, be) in layer_params:
        h = jnp.dot(h, w) + b
        mean = jnp.mean(h, axis=0, keepdims=True)
        var = jnp.mean((h - mean) ** 2, axis=0, keepdims=True)
        h = (h - mean) * jax.lax.rsqrt(var + 1e-5) * g + be
        h = jnp.maximum(h, 0.0)
    return jnp.max(h.reshape(B, S, K, -1), axis=2)


# ---------------------------------------------------------------------------
# Full PointNetSetAbstractionMsg forward
# ---------------------------------------------------------------------------
def point_net_sa_msg_forward(xyz, points, params, npoint, radius_list,
                             nsample_list, fps_key, mm_dtype=jnp.bfloat16,
                             target_rows=1024):
    """xyz [B, 3, N], points [B, D, N] (or None).

    Returns (new_xyz [B, 3, S], new_points_concat [B, D', S])."""
    xyz_t = jnp.transpose(xyz, (0, 2, 1))                     # [B, N, 3]
    points_t = None if points is None else jnp.transpose(points, (0, 2, 1))
    S = npoint

    fps_idx = farthest_point_sample(xyz_t, S, fps_key)        # [B, S]
    new_xyz = index_points(xyz_t, fps_idx)                    # [B, S, 3]

    new_points_list = []
    for i, radius in enumerate(radius_list):
        K = nsample_list[i]
        group_idx = query_ball_point(radius, K, xyz_t, new_xyz)       # [B,S,K]
        grouped_xyz = index_points_group(xyz_t, group_idx)            # [B,S,K,3]
        grouped_xyz = grouped_xyz - new_xyz[:, :, None, :]
        if points_t is not None:
            grouped_pts = index_points_group(points_t, group_idx)     # [B,S,K,D]
            grouped = jnp.concatenate([grouped_pts, grouped_xyz], axis=-1)
        else:
            grouped = grouped_xyz                                      # [B,S,K,D+3]

        new_pts = msg_mlp_max(grouped, params[i], mm_dtype=mm_dtype,
                              target_rows=target_rows)                 # [B,S,Cout]
        new_points_list.append(jnp.transpose(new_pts, (0, 2, 1)))      # [B,Cout,S]

    new_xyz_out = jnp.transpose(new_xyz, (0, 2, 1))                    # [B, 3, S]
    new_points_concat = jnp.concatenate(new_points_list, axis=1)       # [B, D', S]
    return new_xyz_out, new_points_concat


# ---------------------------------------------------------------------------
# Deterministic parameter init (Conv2d 1x1 weight/bias + BN gamma/beta)
# ---------------------------------------------------------------------------
def init_params(key, in_channel, mlp_list):
    params = []
    for mlps in mlp_list:
        layer_params = []
        last = in_channel + 3
        for out_ch in mlps:
            key, k1, k2, k3, k4 = jax.random.split(key, 5)
            w = 0.1 * jax.random.normal(k1, (last, out_ch), jnp.float32)
            b = 0.05 * jax.random.normal(k2, (1, out_ch), jnp.float32)
            g = 1.0 + 0.1 * jax.random.normal(k3, (1, out_ch), jnp.float32)
            be = 0.05 * jax.random.normal(k4, (1, out_ch), jnp.float32)
            layer_params.append((w, b, g, be))
            last = out_ch
        params.append(layer_params)
    return params


if __name__ == "__main__":
    key = jax.random.PRNGKey(0)
    kx, kp, kfps, kpar = jax.random.split(key, 4)

    # Small shapes consistent with the module.  B*S = 20 is deliberately NOT a
    # multiple of the 8-row group tile so the padding/masking path runs, and
    # K is a multiple of 8 so the neighbor max is sublane-aligned.
    B, N, D = 2, 32, 4                  # batch, points, feature channels
    npoint = 10                         # S
    radius_list = [0.4, 0.8]
    nsample_list = [8, 16]
    mlp_list = [[8, 16], [16, 32]]      # D' = 16 + 32 = 48

    xyz = jax.random.uniform(kx, (B, 3, N), jnp.float32)       # [B, 3, N]
    points = jax.random.normal(kp, (B, D, N), jnp.float32)     # [B, D, N]
    params = init_params(kpar, D, mlp_list)

    # --- sanity check of the Pallas MLP path against the plain-JAX reference
    xyz_t = jnp.transpose(xyz, (0, 2, 1))
    pts_t = jnp.transpose(points, (0, 2, 1))
    fps_idx = farthest_point_sample(xyz_t, npoint, kfps)
    new_xyz_t = index_points(xyz_t, fps_idx)
    gi = query_ball_point(radius_list[0], nsample_list[0], xyz_t, new_xyz_t)
    gx = index_points_group(xyz_t, gi) - new_xyz_t[:, :, None, :]
    gp = index_points_group(pts_t, gi)
    grouped = jnp.concatenate([gp, gx], axis=-1)
    out_k = msg_mlp_max(grouped, params[0], mm_dtype=jnp.bfloat16,
                        target_rows=64)
    out_r = msg_mlp_max_reference(grouped, params[0])
    jax.block_until_ready((out_k, out_r))
    denom = float(jnp.max(jnp.abs(out_r))) + 1.0
    rel_err = float(jnp.max(jnp.abs(out_k - out_r))) / denom
    assert rel_err < 0.05, rel_err

    # --- full module forward (jitted), bf16 MXU feed
    fwd = jax.jit(functools.partial(
        point_net_sa_msg_forward, npoint=npoint, radius_list=radius_list,
        nsample_list=nsample_list, fps_key=kfps, mm_dtype=jnp.bfloat16,
        target_rows=64))
    new_xyz, new_points = fwd(xyz, points, params)
    jax.block_until_ready((new_xyz, new_points))

    assert new_xyz.shape == (B, 3, npoint), new_xyz.shape
    assert new_points.shape == (B, sum(m[-1] for m in mlp_list), npoint), \
        new_points.shape
    assert bool(jnp.all(jnp.isfinite(new_xyz)))
    assert bool(jnp.all(jnp.isfinite(new_points)))
    print("KERNEL_OK")
</pallas_src>

<mosaic_0001>
module attributes {stable_mosaic.version = 11 : i64} {
  func.func @_matmul_stats_kernel(%arg0: i32, %arg1: memref<64x7xbf16, #tpu.memory_space<vmem>>, %arg2: memref<7x128xbf16, #tpu.memory_space<vmem>>, %arg3: memref<64x128xf32, #tpu.memory_space<vmem>>, %arg4: memref<8x128xf32, #tpu.memory_space<vmem>>) attributes {dimension_semantics = [#tpu.dimension_semantics<parallel>], iteration_bounds = array<i64: 3>, scalar_prefetch = 0 : i64, scratch_operands = 0 : i64, tpu.core_type = #tpu.core_type<tc>, window_params = [{transform_indices = @transform_0, window_bounds = array<i64: 64, 7>}, {pipeline_mode = #tpu.pipeline_mode<synchronous>, transform_indices = @transform_1, window_bounds = array<i64: 7, 128>}, {transform_indices = @transform_2, window_bounds = array<i64: 64, 128>}, {transform_indices = @transform_3, window_bounds = array<i64: 8, 128>}]} {
    %c0 = arith.constant 0 : index
    %c0_0 = arith.constant 0 : index
    %0 = vector.load %arg1[%c0, %c0_0] : memref<64x7xbf16, #tpu.memory_space<vmem>>, vector<64x7xbf16>
    %c0_1 = arith.constant 0 : index
    %c0_2 = arith.constant 0 : index
    %1 = vector.load %arg2[%c0_1, %c0_2] : memref<7x128xbf16, #tpu.memory_space<vmem>>, vector<7x128xbf16>
    %cst = arith.constant dense<0.000000e+00> : vector<64x128xf32>
    %2 = tpu.matmul %0, %1, %cst {dimension_numbers = #tpu.dot_dimension_numbers<[1], [0], [0], [1], [0, 0, 1, 1], [], []>} : vector<64x7xbf16>, vector<7x128xbf16>, vector<64x128xf32> -> vector<64x128xf32>
    %c0_3 = arith.constant 0 : index
    %c0_4 = arith.constant 0 : index
    %3 = vector.load %arg3[%c0_3, %c0_4] : memref<64x128xf32, #tpu.memory_space<vmem>>, vector<64x128xf32>
    tpu.vector_store %arg3[%c0_3, %c0_4], %2 {strides = array<i32>} : memref<64x128xf32, #tpu.memory_space<vmem>>, vector<64x128xf32>,
    %c64_i32 = arith.constant 64 : i32
    %4 = arith.muli %arg0, %c64_i32 : i32
    %5 = tpu.iota {dimensions = array<i32: 0>} : vector<64x128xi32>
    %6 = vector.broadcast %4 : i32 to vector<64x128xi32>
    %7 = arith.addi %5, %6 : vector<64x128xi32>
    %c160_i32 = arith.constant 160 : i32
    %8 = vector.broadcast %c160_i32 : i32 to vector<64x128xi32>
    %9 = arith.cmpi slt, %7, %8 : vector<64x128xi32>
    %cst_5 = arith.constant 0.000000e+00 : f32
    %10 = vector.broadcast %cst_5 : f32 to vector<64x128xf32>
    %11 = arith.select %9, %2, %10 : vector<64x128xi1>, vector<64x128xf32>
    %cst_6 = arith.constant dense<0.000000e+00> : vector<128xf32>
    %12 = vector.multi_reduction <add>, %11, %cst_6 [0] : vector<64x128xf32> to vector<128xf32>
    %13 = vector.shape_cast %12 : vector<128xf32> to vector<1x128xf32>
    %14 = arith.mulf %11, %2 : vector<64x128xf32>
    %cst_7 = arith.constant dense<0.000000e+00> : vector<128xf32>
    %15 = vector.multi_reduction <add>, %14, %cst_7 [0] : vector<64x128xf32> to vector<128xf32>
    %16 = vector.shape_cast %15 : vector<128xf32> to vector<1x128xf32>
    %cst_8 = arith.constant 0.000000e+00 : f32
    %17 = vector.broadcast %cst_8 : f32 to vector<6x128xf32>
    %18 = tpu.concatenate %13, %16, %17 in 0 : vector<1x128xf32>, vector<1x128xf32>, vector<6x128xf32> -> vector<8x128xf32>
    %c0_9 = arith.constant 0 : index
    %c0_10 = arith.constant 0 : index
    %19 = vector.load %arg4[%c0_9, %c0_10] : memref<8x128xf32, #tpu.memory_space<vmem>>, vector<8x128xf32>
    tpu.vector_store %arg4[%c0_9, %c0_10], %18 {strides = array<i32>} : memref<8x128xf32, #tpu.memory_space<vmem>>, vector<8x128xf32>,
    return
  }
  func.func @transform_0(%arg0: i32) -> (i32, i32) {
    %c0_i32 = arith.constant 0 : i32
    %c0_i32_0 = arith.constant 0 : i32
    return %arg0, %c0_i32 : i32, i32
  }
  func.func @transform_1(%arg0: i32) -> (i32, i32) {
    %c0_i32 = arith.constant 0 : i32
    %c0_i32_0 = arith.constant 0 : i32
    %c0_i32_1 = arith.constant 0 : i32
    return %c0_i32, %c0_i32_0 : i32, i32
  }
  func.func @transform_2(%arg0: i32) -> (i32, i32) {
    %c0_i32 = arith.constant 0 : i32
    %c0_i32_0 = arith.constant 0 : i32
    return %arg0, %c0_i32 : i32, i32
  }
  func.func @transform_3(%arg0: i32) -> (i32, i32) {
    %c0_i32 = arith.constant 0 : i32
    %c0_i32_0 = arith.constant 0 : i32
    return %arg0, %c0_i32 : i32, i32
  }
}

</mosaic_0001>

<llo_original>
// kernel: tpu_custom_call.1
$region0: #{tpu_custom_call.1}
  #allocation0 [shape = 'u32[]', space=smem, size = 0x4, offset = 0x4, fixed_abs, tag = 'smem constant byte address 0x4 - core index']
  #allocation1 [shape = 'u32[144,128]{1,0:T(1,128)}', space=vmem, size = 0x12000, scoped, tag = 'internal scratch']
  %s0 = inlined_call_operand.vmem [shape: bf16[192,7], index: 0, kind: input, shape index: {}]
  %s1 = inlined_call_operand.vmem [shape: bf16[7,128], index: 1, kind: input, shape index: {}]
  %s2 = inlined_call_operand.hbm [shape: f32[192,128], index: 2, kind: output, shape index: {0}]
  %s3 = inlined_call_operand.hbm [shape: f32[24,128], index: 3, kind: output, shape index: {1}]
  %4 = xla_tuple %s2, %s3
  %s5 = sld [smem:[#allocation0]]
  $region49: #{tpu_custom_call.1} parent=0
    _
  %s7 = ssub.s32 1, %s5
  %s8 = scalar_select 0, %s7, %s5
  $region1: #{tpu_custom_call.1} parent=0
    #allocation2 [shape = 'u8[65536]{0}', space=vmem, size = 0x10000, scoped, tag = 'output window, operand 0']
    #allocation3 [shape = 's32[2]{0}', space=sflag, size = 0x8, scoped, tag = 'scoped memory for tpu_custom_call.1']
    #allocation4 [shape = 'u8[8192]{0}', space=vmem, size = 0x2000, scoped, tag = 'output window, operand 1']
    #allocation5 [shape = 's32[2]{0}', space=sflag, size = 0x8, scoped, tag = 'scoped memory for tpu_custom_call.1']
    %9 = vsyncpa [#allocation3], 0
    %s10 = scalar_lea.sflag [#allocation3], 1
    %11 = vsyncpa %s10, 0
    %12 = vsyncpa [#allocation5], 0
    %s13 = scalar_lea.sflag [#allocation5], 1
    %14 = vsyncpa %s13, 0
    loop: start=0, step=1, limit=5
    $region2: #{tpu_custom_call.1} parent=1 // loop_pre_header
      _
    $region3: #{tpu_custom_call.1} parent=1 // loop_header
      %s16 = sphi 0, %s20
      %p17 = scmp.ge.s32.totalorder %s16, 5
      %s26 = sphi 0, %s28
      %s29 = sphi 0, %s26
      %s30 = sphi 0, %s29
      %s46 = sphi 0, %s30
      %s50 = sphi 0, %s50
      %s52 = sphi 0, %s50
      %s53 = sphi 0, %s52
      %s67 = sphi 0, %s53
      %s73 = sphi 0, %s75
      %s76 = sphi 0, %s73
      %s77 = sphi 0, %s76
      %s93 = sphi 0, %s77
      %s99 = sphi 0, %s101
      %s102 = sphi 0, %s99
      %s103 = sphi 0, %s102
      %s119 = sphi 0, %s103
    $region4: #{tpu_custom_call.1} parent=1 // loop_header_branch
      %19 = sbr.rel (%p17) target = $region8
    $region5: #{tpu_custom_call.1} parent=1 // loop_body
      %s21 = ssub.s32 %s16, 1
      %s22 = ssub.s32 %s16, 2
      %s23 = sadd.s32 %s16, 1
      %s24 = ssub.s32 %s16, %s23
      %p25 = scmp.eq.s32.totalorder %s24, 0
      %s27 = sadd.s32 %s26, 1
      %s28 = scalar_select %p25, %s26, %s27
      %p31 = pneg %p25
      %p32 = scmp.eq.s32.totalorder %s16, 2
      %p33 = por %p31, %p32
      %p34 = scmp.ne.s32.totalorder %s26, %s29
      %p35 = scmp.eq.s32.totalorder %s16, 0
      %p36 = por %p34, %p35
      %p37 = scmp.ne.s32.totalorder %s26, %s29
      %p38 = scmp.eq.s32.totalorder %s21, 2
      %p39 = por %p37, %p38
      %p40 = scmp.ne.s32.totalorder %s29, %s30
      %p41 = scmp.eq.s32.totalorder %s21, 0
      %p42 = por %p40, %p41
      %p43 = scmp.ne.s32.totalorder %s29, %s30
      %p44 = scmp.eq.s32.totalorder %s22, 2
      %p45 = por %p43, %p44
      %p47 = scmp.ne.s32.totalorder %s30, %s46
      %p48 = scmp.eq.s32.totalorder %s22, 0
      %p49 = por %p47, %p48
      %s51 = sadd.s32 %s50, 1
      %p54 = scmp.eq.s32.totalorder %s16, 2
      %p55 = scmp.ne.s32.totalorder %s50, %s52
      %p56 = scmp.eq.s32.totalorder %s16, 0
      %p57 = por %p55, %p56
      %p58 = scmp.ne.s32.totalorder %s50, %s52
      %p59 = scmp.eq.s32.totalorder %s21, 2
      %p60 = por %p58, %p59
      %p61 = scmp.ne.s32.totalorder %s52, %s53
      %p62 = scmp.eq.s32.totalorder %s21, 0
      %p63 = por %p61, %p62
      %p64 = scmp.ne.s32.totalorder %s52, %s53
      %p65 = scmp.eq.s32.totalorder %s22, 2
      %p66 = por %p64, %p65
      %p68 = scmp.ne.s32.totalorder %s53, %s67
      %p69 = scmp.eq.s32.totalorder %s22, 0
      %p70 = por %p68, %p69
      %s71 = ssub.s32 %s16, %s23
      %p72 = scmp.eq.s32.totalorder %s71, 0
      %s74 = sadd.s32 %s73, 1
      %s75 = scalar_select %p72, %s73, %s74
      %p78 = pneg %p72
      %p79 = scmp.eq.s32.totalorder %s16, 2
      %p80 = por %p78, %p79
      %p81 = scmp.ne.s32.totalorder %s73, %s76
      %p82 = scmp.eq.s32.totalorder %s16, 0
      %p83 = por %p81, %p82
      %p84 = scmp.ne.s32.totalorder %s73, %s76
      %p85 = scmp.eq.s32.totalorder %s21, 2
      %p86 = por %p84, %p85
      %p87 = scmp.ne.s32.totalorder %s76, %s77
      %p88 = scmp.eq.s32.totalorder %s21, 0
      %p89 = por %p87, %p88
      %p90 = scmp.ne.s32.totalorder %s76, %s77
      %p91 = scmp.eq.s32.totalorder %s22, 2
      %p92 = por %p90, %p91
      %p94 = scmp.ne.s32.totalorder %s77, %s93
      %p95 = scmp.eq.s32.totalorder %s22, 0
      %p96 = por %p94, %p95
      %s97 = ssub.s32 %s16, %s23
      %p98 = scmp.eq.s32.totalorder %s97, 0
      %s100 = sadd.s32 %s99, 1
      %s101 = scalar_select %p98, %s99, %s100
      %p104 = pneg %p98
      %p105 = scmp.eq.s32.totalorder %s16, 2
      %p106 = por %p104, %p105
      %p107 = scmp.ne.s32.totalorder %s99, %s102
      %p108 = scmp.eq.s32.totalorder %s16, 0
      %p109 = por %p107, %p108
      %p110 = scmp.ne.s32.totalorder %s99, %s102
      %p111 = scmp.eq.s32.totalorder %s21, 2
      %p112 = por %p110, %p111
      %p113 = scmp.ne.s32.totalorder %s102, %s103
      %p114 = scmp.eq.s32.totalorder %s21, 0
      %p115 = por %p113, %p114
      %p116 = scmp.ne.s32.totalorder %s102, %s103
      %p117 = scmp.eq.s32.totalorder %s22, 2
      %p118 = por %p116, %p117
      %p120 = scmp.ne.s32.totalorder %s103, %s119
      %p121 = scmp.eq.s32.totalorder %s22, 0
      %p122 = por %p120, %p121
      %p123 = scmp.le.s32.totalorder 1, %s16
      %p124 = scmp.lt.s32.totalorder %s16, 4
      %p125 = pnand %p123, %p124
      %p126 = pneg %p125
      // Predicated region
      $region9: #{tpu_custom_call.1} parent=5 // pred_check
        _
      $region10: #{tpu_custom_call.1} parent=5 // pred_check_branch
        %128 = sbr.rel (%p125) target = $region12
      $region11: #{tpu_custom_call.1} parent=5 // pred_region
        %s129 = ssub.s32 %s16, 1
        // Predicated region
        $region13: #{tpu_custom_call.1} parent=11 // pred_check
          %p130 = pneg %p63
        $region14: #{tpu_custom_call.1} parent=11 // pred_check_branch
          %132 = sbr.rel (%p130) target = $region16
        $region15: #{tpu_custom_call.1} parent=11 // pred_region
          _
        $region16: #{tpu_custom_call.1} parent=11 // pred_fallthru
          _
      $region12: #{tpu_custom_call.1} parent=5 // pred_fallthru
        _
      %p133 = scmp.lt.s32.totalorder %s16, 3
      // Predicated region
      $region17: #{tpu_custom_call.1} parent=5 // pred_check
        %p134 = pneg %p133
      $region18: #{tpu_custom_call.1} parent=5 // pred_check_branch
        %136 = sbr.rel (%p134) target = $region20
      $region19: #{tpu_custom_call.1} parent=5 // pred_region
        // Predicated region
        $region21: #{tpu_custom_call.1} parent=19 // pred_check
          %p137 = pneg %p36
        $region22: #{tpu_custom_call.1} parent=19 // pred_check_branch
          %139 = sbr.rel (%p137) target = $region24
        $region23: #{tpu_custom_call.1} parent=19 // pred_region
          %s140 = smul.u32 8, %s16
          %p141 = scmp.lt.s32.totalorder %s140, 23
          %s142 = scalar_select %p141, %s140, 23
          %s143 = smul.addr %s142, 4
          %s144 = scalar_lea.vmem %s0, %s143
          %s145 = smul.u32 8, %s16
        $region24: #{tpu_custom_call.1} parent=19 // pred_fallthru
          _
      $region20: #{tpu_custom_call.1} parent=5 // pred_fallthru
        _
      %p146 = scmp.le.s32.totalorder 1, %s16
      %p147 = scmp.lt.s32.totalorder %s16, 4
      %p148 = pnand %p146, %p147
      %p149 = pneg %p148
      // Predicated region
      $region25: #{tpu_custom_call.1} parent=5 // pred_check
        _
      $region26: #{tpu_custom_call.1} parent=5 // pred_check_branch
        %151 = sbr.rel (%p148) target = $region28
      $region27: #{tpu_custom_call.1} parent=5 // pred_region
        %s152 = ssub.s32 %s16, 1
        %s153 = smul.u32 8, %s21
        %p154 = scmp.lt.s32.totalorder %s153, 23
        %s155 = scalar_select %p154, %s153, 23
        %s156 = smul.addr %s155, 4
        %s157 = scalar_lea.vmem %s0, %s156
        %p158 = pneg %p42
        %p159 = pneg %p39
        %p160 = pneg %p63
        %p161 = pneg %p60
        %p162 = pneg %p89
        %p163 = pneg %p86
        %s164 = sand.u32 %s76, 1
        %s165 = scalar_lea.sflag [#allocation3], %s164
        %s166 = sand.u32 %s76, 1
        %s167 = smul.addr %s166, 64
        %s168 = scalar_lea.vmem [#allocation2], %s167
        %p169 = pneg %p115
        %p170 = pneg %p112
        %s171 = sand.u32 %s102, 1
        %s172 = scalar_lea.sflag [#allocation5], %s171
        %s173 = sand.u32 %s102, 1
        %s174 = smul.addr %s173, 8
        %s175 = scalar_lea.vmem [#allocation4], %s174
        %s176 = smul.u32 8, %s21
        %p177 = scmp.lt.s32.totalorder %s176, 23
        %s178 = scalar_select %p177, %s176, 23
        %s179 = smul.addr %s178, 4
        %s180 = scalar_lea.vmem %s0, %s179
        %s181 = smul.u32 8, %s21
        %s182 = smul.u32 8, %s21
        %v184 = vld [vmem:[%s180] sm:$0xf]
        %v185 = vld [vmem:[%s180 + $0x4] sm:$0xf]
        %v186 = vld [vmem:[%s180 + $0x8] sm:$0xf]
        %v187 = vld [vmem:[%s180 + $0xc] sm:$0xf]
        %v188 = vld [vmem:[%s180 + $0x10] sm:$0xf]
        %v189 = vld [vmem:[%s180 + $0x14] sm:$0xf]
        %v190 = vld [vmem:[%s180 + $0x18] sm:$0xf]
        %v191 = vld [vmem:[%s180 + $0x1c] sm:$0xf]
        %v192 = vld [vmem:[%s1] sm:$0xf]
        %v201 = vunpack.c.l.b16 %v184
        %v202 = vunpack.c.l.b16 %v185
        %v203 = vunpack.c.l.b16 %v186
        %v204 = vunpack.c.l.b16 %v187
        %v205 = vunpack.c.l.b16 %v188
        %v206 = vunpack.c.l.b16 %v189
        %v207 = vunpack.c.l.b16 %v190
        %v208 = vunpack.c.l.b16 %v191
        %v209 = vpack.c.b16 %v202, %v201
        %v210 = vpack.c.b16 %v204, %v203
        %v211 = vpack.c.b16 %v206, %v205
        %v212 = vpack.c.b16 %v208, %v207
        %vm213 = vcmask 56320
        %v215 = vsel %vm213, %v209, 0
        %v218 = vsel %vm213, %v210, 0
        %v221 = vsel %vm213, %v211, 0
        %v224 = vsel %vm213, %v212, 0
        %vm226 = vcmask 1042432
        %vm227 = vcmask 1043456
        %v228 = vsel %vm226, 4294967295, 65535
        %v229 = vsel %vm227, %v228, 0
        %v231 = vand.u32 %v192, %v229
        %233 = vmatprep.subr.bf16.mxu0 0
        %234 = vmatpush1.bf16.msra.mxu0 0
        %235 = vmatprep.subr.bf16.mxu0 0
        %236 = vmatpush1.bf16.msra.mxu0 0
        %237 = vmatprep.subr.bf16.mxu0 0
        %238 = vmatpush1.bf16.msra.mxu0 0
        %239 = vmatprep.subr.bf16.mxu0 0
        %240 = vmatpush1.bf16.msra.mxu0 0
        %241 = vmatprep.subr.bf16.mxu0 0
        %242 = vmatpush1.bf16.msra.mxu0 0
        %243 = vmatprep.subr.bf16.mxu0 0
        %244 = vmatpush1.bf16.msra.mxu0 0
        %245 = vmatprep.subr.bf16.mxu0 0
        %246 = vmatpush1.bf16.msra.mxu0 0
        %247 = vmatprep.subr.bf16.mxu0 0
        %248 = vmatpush1.bf16.msra.mxu0 %v231
        %249 = vmatprep.subr.bf16.mxu0 0
        %250 = vmatpush2.bf16.msra.mxu0 0
        %251 = vmatprep.subr.bf16.mxu0 0
        %252 = vmatpush2.bf16.msra.mxu0 0
        %253 = vmatprep.subr.bf16.mxu0 0
        %254 = vmatpush2.bf16.msra.mxu0 0
        %255 = vmatprep.subr.bf16.mxu0 0
        %256 = vmatpush2.bf16.msra.mxu0 0
        %257 = vmatprep.subr.bf16.mxu0 0
        %258 = vmatpush2.bf16.msra.mxu0 0
        %259 = vmatprep.subr.bf16.mxu0 0
        %260 = vmatpush2.bf16.msra.mxu0 0
        %261 = vmatprep.subr.bf16.mxu0 0
        %262 = vmatpush2.bf16.msra.mxu0 0
        %263 = vmatprep.subr.bf16.mxu0 0
        %264 = vmatpush2.bf16.msra.mxu0 0
        %265 = vmatprep.mubr.bf16.mxu0 0
        %266 = vmatmul.mubr.bf16.gmra.mxu0 %v215
        %v267 = vpop.f32.mrf.mxu0
        %v268 = vadd.f32 0.0, %v267
        %v269 = vpop.f32.mrf.mxu0
        %v270 = vpop.f32.mrf.mxu0
        %v271 = vadd.f32 0.0, %v270
        %v272 = vpop.f32.mrf.mxu0
        %273 = vmatprep.mubr.bf16.mxu0 0
        %274 = vmatmul.mubr.bf16.gmra.mxu0 %v218
        %v275 = vpop.f32.mrf.mxu0
        %v276 = vadd.f32 0.0, %v275
        %v277 = vpop.f32.mrf.mxu0
        %v278 = vpop.f32.mrf.mxu0
        %v279 = vadd.f32 0.0, %v278
        %v280 = vpop.f32.mrf.mxu0
        %281 = vmatprep.mubr.bf16.mxu0 0
        %282 = vmatmul.mubr.bf16.gmra.mxu0 %v221
        %v283 = vpop.f32.mrf.mxu0
        %v284 = vadd.f32 0.0, %v283
        %v285 = vpop.f32.mrf.mxu0
        %v286 = vpop.f32.mrf.mxu0
        %v287 = vadd.f32 0.0, %v286
        %v288 = vpop.f32.mrf.mxu0
        %289 = vmatprep.mubr.bf16.mxu0 0
        %290 = vmatmul.mubr.bf16.gmra.mxu0 %v224
        %v291 = vpop.f32.mrf.mxu0
        %v292 = vadd.f32 0.0, %v291
        %v293 = vpop.f32.mrf.mxu0
        %v294 = vpop.f32.mrf.mxu0
        %v295 = vadd.f32 0.0, %v294
        %v296 = vpop.f32.mrf.mxu0
        %297 = vdwg.mxu0
        %298 = vst [vmem:[%s168] sm:$0xff] %v268
        %299 = vst [vmem:[%s168 + $0x8] sm:$0xff] %v271
        %300 = vst [vmem:[%s168 + $0x10] sm:$0xff] %v276
        %301 = vst [vmem:[%s168 + $0x18] sm:$0xff] %v279
        %302 = vst [vmem:[%s168 + $0x20] sm:$0xff] %v284
        %303 = vst [vmem:[%s168 + $0x28] sm:$0xff] %v287
        %304 = vst [vmem:[%s168 + $0x30] sm:$0xff] %v292
        %305 = vst [vmem:[%s168 + $0x38] sm:$0xff] %v295
        %s306 = smul.u32 %s21, 64
        %v307 = vlaneseq
        %v308 = vshrl.u32 %v307, 7
        %v309 = vadd.s32 %v308, 8
        %v310 = vadd.s32 %v308, 16
        %v311 = vadd.s32 %v308, 24
        %v312 = vadd.s32 %v308, 32
        %v313 = vadd.s32 %v308, 40
        %v314 = vadd.s32 %v308, 48
        %v315 = vadd.s32 %v308, 56
        %v316 = vstv %s306
        %v317 = vadd.s32 %v308, %v316
        %v318 = vadd.s32 %v309, %v316
        %v319 = vadd.s32 %v310, %v316
        %v320 = vadd.s32 %v311, %v316
        %v321 = vadd.s32 %v312, %v316
        %v322 = vadd.s32 %v313, %v316
        %v323 = vadd.s32 %v314, %v316
        %v324 = vadd.s32 %v315, %v316
        %vm325 = vcmp.lt.s32.totalorder %v317, 160
        %vm326 = vcmp.lt.s32.totalorder %v318, 160
        %vm327 = vcmp.lt.s32.totalorder %v319, 160
        %vm328 = vcmp.lt.s32.totalorder %v320, 160
        %vm329 = vcmp.lt.s32.totalorder %v321, 160
        %vm330 = vcmp.lt.s32.totalorder %v322, 160
        %vm331 = vcmp.lt.s32.totalorder %v323, 160
        %vm332 = vcmp.lt.s32.totalorder %v324, 160
        %v333 = vsel %vm325, %v268, 0.0
        %v334 = vsel %vm326, %v271, 0.0
        %v335 = vsel %vm327, %v276, 0.0
        %v336 = vsel %vm328, %v279, 0.0
        %v337 = vsel %vm329, %v284, 0.0
        %v338 = vsel %vm330, %v287, 0.0
        %v339 = vsel %vm331, %v292, 0.0
        %v340 = vsel %vm332, %v295, 0.0
        %v341 = vadd.f32 %v333, %v334
        %v342 = vadd.f32 %v341, %v335
        %v343 = vadd.f32 %v342, %v336
        %v344 = vadd.f32 %v343, %v337
        %v345 = vadd.f32 %v344, %v338
        %v346 = vadd.f32 %v345, %v339
        %v347 = vadd.f32 %v346, %v340
        %v348 = vrot.slane %v347, 4
        %v349 = vadd.f32 %v347, %v348
        %v350 = vrot.slane %v349, 2
        %v351 = vadd.f32 %v349, %v350
        %v352 = vrot.slane %v351, 1
        %v353 = vadd.f32 %v351, %v352
        %v354 = vmul.f32 %v333, %v268
        %v355 = vmul.f32 %v334, %v271
        %v356 = vmul.f32 %v335, %v276
        %v357 = vmul.f32 %v336, %v279
        %v358 = vmul.f32 %v337, %v284
        %v359 = vmul.f32 %v338, %v287
        %v360 = vmul.f32 %v339, %v292
        %v361 = vmul.f32 %v340, %v295
        %v362 = vadd.f32 %v354, %v355
        %v363 = vadd.f32 %v362, %v356
        %v364 = vadd.f32 %v363, %v357
        %v365 = vadd.f32 %v364, %v358
        %v366 = vadd.f32 %v365, %v359
        %v367 = vadd.f32 %v366, %v360
        %v368 = vadd.f32 %v367, %v361
        %v369 = vrot.slane %v368, 4
        %v370 = vadd.f32 %v368, %v369
        %v371 = vrot.slane %v370, 2
        %v372 = vadd.f32 %v370, %v371
        %v373 = vrot.slane %v372, 1
        %v374 = vadd.f32 %v372, %v373
        %vm375 = vcmask 1040384
        %v376 = vsel %vm375, %v353, %v374
        %vm377 = vcmask 1041408
        %v378 = vsel %vm377, %v376, 0.0
        %379 = vst [vmem:[%s175] sm:$0xff] %v378
        %s380 = sand.u32 %s76, 1
        %s381 = scalar_lea.sflag [#allocation3], %s380
        %s382 = sand.u32 %s76, 1
        %s383 = smul.addr %s382, 64
        %s384 = scalar_lea.vmem [#allocation2], %s383
        %s385 = sand.u32 %s102, 1
        %s386 = scalar_lea.sflag [#allocation5], %s385
        %s387 = sand.u32 %s102, 1
        %s388 = smul.addr %s387, 8
        %s389 = scalar_lea.vmem [#allocation4], %s388
        // Predicated region
        $region29: #{tpu_custom_call.1} parent=27 // pred_check
          %p390 = pneg %p86
        $region30: #{tpu_custom_call.1} parent=27 // pred_check_branch
          %392 = sbr.rel (%p390) target = $region32
        $region31: #{tpu_custom_call.1} parent=27 // pred_region
          %s393 = smul.u32 8, %s21
          %s395 = ssub.s32 1024, 1024
          %396 = vsyncadd %s381, %s395
          %s397 = smul.addr %s393, 128
          %s398 = scalar_lea.hbm %s2, %s397
          %s399 = sshll.u32 %s384, 4
          %s400 = int_to_ptr.vmem [resolvable:$true] %s399
          %405 = dma.vmem_to_hbm [thread:$0]  %s400, 1024, %s398, %s381, 128, 128, 8
        $region32: #{tpu_custom_call.1} parent=27 // pred_fallthru
          _
        // Predicated region
        $region33: #{tpu_custom_call.1} parent=27 // pred_check
          %p406 = pneg %p112
        $region34: #{tpu_custom_call.1} parent=27 // pred_check_branch
          %408 = sbr.rel (%p406) target = $region36
        $region35: #{tpu_custom_call.1} parent=27 // pred_region
          %s410 = ssub.s32 128, 128
          %411 = vsyncadd %s386, %s410
          %s412 = smul.addr %s21, 128
          %s413 = scalar_lea.hbm %s3, %s412
          %s415 = sshll.u32 %s389, 4
          %s416 = int_to_ptr.vmem [resolvable:$true] %s415
          %418 = dma.vmem_to_hbm [thread:$0]  %s416, 128, %s413, %s386
        $region36: #{tpu_custom_call.1} parent=27 // pred_fallthru
          _
      $region28: #{tpu_custom_call.1} parent=5 // pred_fallthru
        _
      %p419 = scmp.le.s32.totalorder 2, %s16
      // Predicated region
      $region37: #{tpu_custom_call.1} parent=5 // pred_check
        %p420 = pneg %p419
      $region38: #{tpu_custom_call.1} parent=5 // pred_check_branch
        %422 = sbr.rel (%p420) target = $region40
      $region39: #{tpu_custom_call.1} parent=5 // pred_region
        %s423 = ssub.s32 %s16, 2
        // Predicated region
        $region41: #{tpu_custom_call.1} parent=39 // pred_check
          %p424 = pneg %p92
        $region42: #{tpu_custom_call.1} parent=39 // pred_check_branch
          %426 = sbr.rel (%p424) target = $region44
        $region43: #{tpu_custom_call.1} parent=39 // pred_region
          %s427 = sand.u32 %s77, 1
          %s428 = scalar_lea.sflag [#allocation3], %s427
          %s429 = sand.u32 %s77, 1
          %s430 = smul.addr %s429, 64
          %s431 = scalar_lea.vmem [#allocation2], %s430
          %432 = dma.done %s428, 1024
        $region44: #{tpu_custom_call.1} parent=39 // pred_fallthru
          _
        // Predicated region
        $region45: #{tpu_custom_call.1} parent=39 // pred_check
          %p433 = pneg %p118
        $region46: #{tpu_custom_call.1} parent=39 // pred_check_branch
          %435 = sbr.rel (%p433) target = $region48
        $region47: #{tpu_custom_call.1} parent=39 // pred_region
          %s436 = sand.u32 %s103, 1
          %s437 = scalar_lea.sflag [#allocation5], %s436
          %s438 = sand.u32 %s103, 1
          %s439 = smul.addr %s438, 8
          %s440 = scalar_lea.vmem [#allocation4], %s439
          %441 = dma.done %s437, 128
        $region48: #{tpu_custom_call.1} parent=39 // pred_fallthru
          _
      $region40: #{tpu_custom_call.1} parent=5 // pred_fallthru
        _
    $region6: #{tpu_custom_call.1} parent=1 // loop_footer
      %s20 = sadd.s32 1, %s16
    $region7: #{tpu_custom_call.1} parent=1 // loop_footer_branch
      %15 = sbr.rel target = $region3
    $region8: #{tpu_custom_call.1} parent=1 // loop_exit
      _
    %442 = vsyncpa [#allocation3], 1
    %s443 = scalar_lea.sflag [#allocation3], 1
    %444 = vsyncpa %s443, 1
    %445 = vsyncpa [#allocation5], 1
    %s446 = scalar_lea.sflag [#allocation5], 1
    %447 = vsyncpa %s446, 1

</llo_original>
